<compile_context>
chip_gen: v7x
topology: tpu7x:2x2x1
jax: 0.10.0
libtpu: 0.0.40
codegen_flags: <defaults>
</compile_context>

<pallas_src>
import functools

import jax
import jax.numpy as jnp
from jax.experimental import pallas as pl
from jax.experimental.pallas import tpu as pltpu


def _round_up(x: int, m: int) -> int:
    return ((x + m - 1) // m) * m


def _gather_pad_kernel(idx_ref, emb_ref, out_ref):
    """One grid step produces one (TN, D) output tile.

    idx_ref: (TN, 1) int32 -- embedding row per output row; -1 => zero row
    emb_ref: (L, D) float  -- full embedding table, resident in VMEM
    out_ref: (TN, D) x.dtype
    """
    idx = idx_ref[...]                                            # (TN, 1)
    L = emb_ref.shape[0]
    col = jax.lax.broadcasted_iota(jnp.int32, (idx.shape[0], L), 1)
    onehot = (col == idx).astype(emb_ref.dtype)                   # -1 rows -> all zeros
    rows = jnp.dot(onehot, emb_ref[...], preferred_element_type=jnp.float32)
    out_ref[...] = rows.astype(out_ref.dtype)


@jax.jit
def absolute_spatial_positional_embedding(x, emb_weight, spatial_indices_sequence):
    """x: (B, N, D); emb_weight: (L, D) float32; spatial_indices_sequence: (L,) int32
    (already trimmed of its last element, as done in __init__).
    Returns (1, n_rows, D) in x.dtype, where n_rows = 1 + min(N-1, L)
    (identical to the PyTorch slice-then-pad behavior)."""
    N = x.shape[1]
    L, D = emb_weight.shape

    # Static truncation, exactly like `sc[:, :N-1, :]` in the reference.
    idx_used = spatial_indices_sequence[: N - 1].astype(jnp.int32)
    n_rows = 1 + idx_used.shape[0]        # zero pad row + gathered rows

    # Tile rows in sublane-aligned blocks; pad tail rows with the -1 sentinel.
    TN = min(256, _round_up(n_rows, 8))
    n_pad = _round_up(n_rows, TN)
    idx_full = jnp.concatenate(
        [jnp.full((1,), -1, jnp.int32),                 # pad row -> zeros
         idx_used,
         jnp.full((n_pad - n_rows,), -1, jnp.int32)])   # tail padding -> zeros
    idx2d = idx_full[:, None]                            # (n_pad, 1)

    out = pl.pallas_call(
        _gather_pad_kernel,
        out_shape=jax.ShapeDtypeStruct((n_pad, D), x.dtype),
        grid=(n_pad // TN,),
        in_specs=[
            pl.BlockSpec((TN, 1), lambda i: (i, 0)),     # per-tile row indices
            pl.BlockSpec((L, D), lambda i: (0, 0)),      # full table, VMEM-resident
        ],
        out_specs=pl.BlockSpec((TN, D), lambda i: (i, 0)),
        compiler_params=pltpu.CompilerParams(
            dimension_semantics=("parallel",)),
    )(idx2d, emb_weight)

    return out[None, :n_rows, :]


def _reference(x, emb_weight, spatial_indices_sequence):
    """Pure-JAX reference mirroring the PyTorch forward."""
    N = x.shape[1]
    sc = emb_weight[spatial_indices_sequence]            # (L, D)
    sc = sc[None, : N - 1, :].astype(x.dtype)            # (1, N-1, D)
    sc = jnp.pad(sc, ((0, 0), (1, 0), (0, 0)))           # prepend zero row
    return sc


if __name__ == "__main__":
    key = jax.random.PRNGKey(0)
    k_emb, k_x = jax.random.split(key)

    D = 32          # embedding dim
    L0 = 9          # original spatial_indices_sequence length
    L = L0 - 1      # trimmed length == num_embeddings
    B, N = 2, 8     # x: (batch, seq, dim); N-1 <= L

    # Deterministic "buffer" of spatial indices (values < num_embeddings),
    # trimmed of its last element as in __init__.
    spatial_indices_full = jnp.array([3, 1, 4, 0, 2, 6, 5, 7, 0], dtype=jnp.int32)
    spatial_indices = spatial_indices_full[:-1]          # (L,)

    # Deterministic embedding table (nn.Embedding(L, D) weight).
    emb_weight = jax.random.normal(k_emb, (L, D), dtype=jnp.float32)

    x = jax.random.normal(k_x, (B, N, D), dtype=jnp.float32)

    out = absolute_spatial_positional_embedding(x, emb_weight, spatial_indices)
    out = jax.block_until_ready(out)

    ref = _reference(x, emb_weight, spatial_indices)
    assert out.shape == (1, N, D), out.shape
    assert out.dtype == x.dtype, out.dtype
    assert jnp.allclose(out, ref, atol=1e-6), "mismatch vs reference"

    print("KERNEL_OK")
</pallas_src>

<mosaic_0001>
module attributes {stable_mosaic.version = 11 : i64} {
  func.func @_gather_pad_kernel(%arg0: i32, %arg1: memref<8x1xi32, #tpu.memory_space<vmem>>, %arg2: memref<8x32xf32, #tpu.memory_space<vmem>>, %arg3: memref<8x32xf32, #tpu.memory_space<vmem>>) attributes {dimension_semantics = [#tpu.dimension_semantics<parallel>], iteration_bounds = array<i64: 1>, scalar_prefetch = 0 : i64, scratch_operands = 0 : i64, tpu.core_type = #tpu.core_type<tc>, window_params = [{transform_indices = @transform_0, window_bounds = array<i64: 8, 1>}, {pipeline_mode = #tpu.pipeline_mode<synchronous>, transform_indices = @transform_1, window_bounds = array<i64: 8, 32>}, {transform_indices = @transform_2, window_bounds = array<i64: 8, 32>}]} {
    %c0 = arith.constant 0 : index
    %c0_0 = arith.constant 0 : index
    %0 = vector.load %arg1[%c0, %c0_0] : memref<8x1xi32, #tpu.memory_space<vmem>>, vector<8x1xi32>
    %1 = tpu.iota {dimensions = array<i32: 1>} : vector<8x8xi32>
    %2 = vector.broadcast %0 : vector<8x1xi32> to vector<8x8xi32>
    %3 = arith.cmpi eq, %1, %2 : vector<8x8xi32>
    %4 = arith.extui %3 : vector<8x8xi1> to vector<8x8xi32>
    %5 = arith.sitofp %4 : vector<8x8xi32> to vector<8x8xf32>
    %c0_1 = arith.constant 0 : index
    %c0_2 = arith.constant 0 : index
    %6 = vector.load %arg2[%c0_1, %c0_2] : memref<8x32xf32, #tpu.memory_space<vmem>>, vector<8x32xf32>
    %cst = arith.constant dense<0.000000e+00> : vector<8x32xf32>
    %7 = tpu.matmul %5, %6, %cst {dimension_numbers = #tpu.dot_dimension_numbers<[1], [0], [0], [1], [0, 0, 1, 1], [], []>} : vector<8x8xf32>, vector<8x32xf32>, vector<8x32xf32> -> vector<8x32xf32>
    %c0_3 = arith.constant 0 : index
    %c0_4 = arith.constant 0 : index
    %8 = vector.load %arg3[%c0_3, %c0_4] : memref<8x32xf32, #tpu.memory_space<vmem>>, vector<8x32xf32>
    tpu.vector_store %arg3[%c0_3, %c0_4], %7 {strides = array<i32>} : memref<8x32xf32, #tpu.memory_space<vmem>>, vector<8x32xf32>,
    return
  }
  func.func @transform_0(%arg0: i32) -> (i32, i32) {
    %c0_i32 = arith.constant 0 : i32
    %c0_i32_0 = arith.constant 0 : i32
    return %arg0, %c0_i32 : i32, i32
  }
  func.func @transform_1(%arg0: i32) -> (i32, i32) {
    %c0_i32 = arith.constant 0 : i32
    %c0_i32_0 = arith.constant 0 : i32
    %c0_i32_1 = arith.constant 0 : i32
    return %c0_i32, %c0_i32_0 : i32, i32
  }
  func.func @transform_2(%arg0: i32) -> (i32, i32) {
    %c0_i32 = arith.constant 0 : i32
    %c0_i32_0 = arith.constant 0 : i32
    return %arg0, %c0_i32 : i32, i32
  }
}

</mosaic_0001>

<llo_original>
// kernel: absolute_spatial_positional_embedding.1
$region0: #{absolute_spatial_positional_embedding.1}
  #allocation0 [shape = 'u32[]', space=smem, size = 0x4, offset = 0x4, fixed_abs, tag = 'smem constant byte address 0x4 - core index']
  #allocation1 [shape = 'u32[144,128]{1,0:T(1,128)}', space=vmem, size = 0x12000, scoped, tag = 'internal scratch']
  %s0 = inlined_call_operand.vmem [shape: s32[8,1], index: 0, kind: input, shape index: {}]
  %s1 = inlined_call_operand.vmem [shape: f32[8,32], index: 1, kind: input, shape index: {}]
  %s2 = inlined_call_operand.hbm [shape: f32[8,32], index: 2, kind: output, shape index: {}]
  %s3 = sld [smem:[#allocation0]]
  $region18: #{absolute_spatial_positional_embedding.1} parent=0
    _
  %s5 = ssub.s32 1, %s3
  %s6 = scalar_select 0, %s5, %s3
  $region1: #{absolute_spatial_positional_embedding.1} parent=0
    #allocation2 [shape = 'u8[4096]{0}', space=vmem, size = 0x1000, scoped, tag = 'output window, operand 0, single buffered']
    #allocation3 [shape = 's32[1]{0}', space=sflag, size = 0x4, scoped, tag = 'scoped memory for absolute_spatial_positional_embedding.1']
    %7 = vsyncpa [#allocation3], 0
    // Predicated region
    $region2: #{absolute_spatial_positional_embedding.1} parent=1 // pred_check
      _
    $region3: #{absolute_spatial_positional_embedding.1} parent=1 // pred_check_branch
      %9 = sbr.rel (0) target = $region5
    $region4: #{absolute_spatial_positional_embedding.1} parent=1 // pred_region
      _
    $region5: #{absolute_spatial_positional_embedding.1} parent=1 // pred_fallthru
      _
    // Predicated region
    $region6: #{absolute_spatial_positional_embedding.1} parent=1 // pred_check
      _
    $region7: #{absolute_spatial_positional_embedding.1} parent=1 // pred_check_branch
      %11 = sbr.rel (0) target = $region9
    $region8: #{absolute_spatial_positional_embedding.1} parent=1 // pred_region
      _
    $region9: #{absolute_spatial_positional_embedding.1} parent=1 // pred_fallthru
      _
    %v12 = vld [vmem:[%s0] sm:$0xff]
    %v13 = vlaneseq
    %v14 = vand.u32 %v13, 127
    %15 = vset.pattern.permute.xlu0 0
    %16 = vperm.xlu0 %15, %v12
    %v17 = vpop.permute.xlu0 %16
    %vm18 = vcmp.eq.s32.totalorder %v14, %v17
    %v19 = vsel %vm18, 1, 0
    %v20 = vcvt.s32.f32 %v19
    %v21 = vld [vmem:[%s1] sm:$0xff]
    %vm22 = vcmask 64512
    %v24 = vsel %vm22, %v20, 0
    %26 = vmatprep.subr.mxu0 0.0
    %27 = vmatpush1.msra.mxu0 %v21
    %28 = vmatprep.subr.mxu0 0.0
    %29 = vmatpush1.msra.mxu0 0.0
    %30 = vmatprep.subr.mxu0 0.0
    %31 = vmatpush1.msra.mxu0 0.0
    %32 = vmatprep.subr.mxu0 0.0
    %33 = vmatpush1.msra.mxu0 0.0
    %34 = vmatprep.subr.mxu0 0.0
    %35 = vmatpush1.msra.mxu0 0.0
    %36 = vmatprep.subr.mxu0 0.0
    %37 = vmatpush1.msra.mxu0 0.0
    %38 = vmatprep.subr.mxu0 0.0
    %39 = vmatpush1.msra.mxu0 0.0
    %40 = vmatprep.subr.mxu0 0.0
    %41 = vmatpush1.msra.mxu0 0.0
    %42 = vmatprep.subr.mxu0 0.0
    %43 = vmatpush1.msra.mxu0 0.0
    %44 = vmatprep.subr.mxu0 0.0
    %45 = vmatpush1.msra.mxu0 0.0
    %46 = vmatprep.subr.mxu0 0.0
    %47 = vmatpush1.msra.mxu0 0.0
    %48 = vmatprep.subr.mxu0 0.0
    %49 = vmatpush1.msra.mxu0 0.0
    %50 = vmatprep.subr.mxu0 0.0
    %51 = vmatpush1.msra.mxu0 0.0
    %52 = vmatprep.subr.mxu0 0.0
    %53 = vmatpush1.msra.mxu0 0.0
    %54 = vmatprep.subr.mxu0 0.0
    %55 = vmatpush1.msra.mxu0 0.0
    %56 = vmatprep.subr.mxu0 0.0
    %57 = vmatpush1.msra.mxu0 0.0
    %58 = vmatprep.subr.mxu0 0.0
    %59 = vmatpush1.msra.mxu0 0.0
    %60 = vmatprep.subr.mxu0 0.0
    %61 = vmatpush1.msra.mxu0 0.0
    %62 = vmatprep.subr.mxu0 0.0
    %63 = vmatpush1.msra.mxu0 0.0
    %64 = vmatprep.subr.mxu0 0.0
    %65 = vmatpush1.msra.mxu0 0.0
    %66 = vmatprep.subr.mxu0 0.0
    %67 = vmatpush1.msra.mxu0 0.0
    %68 = vmatprep.subr.mxu0 0.0
    %69 = vmatpush1.msra.mxu0 0.0
    %70 = vmatprep.subr.mxu0 0.0
    %71 = vmatpush1.msra.mxu0 0.0
    %72 = vmatprep.subr.mxu0 0.0
    %73 = vmatpush1.msra.mxu0 0.0
    %74 = vmatprep.subr.mxu0 0.0
    %75 = vmatpush1.msra.mxu0 0.0
    %76 = vmatprep.subr.mxu0 0.0
    %77 = vmatpush1.msra.mxu0 0.0
    %78 = vmatprep.subr.mxu0 0.0
    %79 = vmatpush1.msra.mxu0 0.0
    %80 = vmatprep.subr.mxu0 0.0
    %81 = vmatpush1.msra.mxu0 0.0
    %82 = vmatprep.subr.mxu0 0.0
    %83 = vmatpush1.msra.mxu0 0.0
    %84 = vmatprep.subr.mxu0 0.0
    %85 = vmatpush1.msra.mxu0 0.0
    %86 = vmatprep.subr.mxu0 0.0
    %87 = vmatpush1.msra.mxu0 0.0
    %88 = vmatprep.subr.mxu0 0.0
    %89 = vmatpush1.msra.mxu0 0.0
    %90 = vmatprep.mubr.f32.mxu0 0.0
    %91 = vmatmul.mubr.f32.gmra.mrb[0].mxu0 %v24
    %v92 = vpop.f32.mrb[0].mxu0
    %v93 = vadd.f32 0.0, %v92
    %v94 = vpop.f32.mrb[0].mxu0
    %95 = vdwg.mxu0
    %vm96 = vcmask 261120
    %97 = vst.msk [vmem:[#allocation2] sm:$0xff] %vm96, %v93
    // Predicated region
    $region10: #{absolute_spatial_positional_embedding.1} parent=1 // pred_check
      _
    $region11: #{absolute_spatial_positional_embedding.1} parent=1 // pred_check_branch
      %99 = sbr.rel (0) target = $region13
    $region12: #{absolute_spatial_positional_embedding.1} parent=1 // pred_region
      %s101 = ssub.s32 128, 128
      %102 = vsyncadd [#allocation3], %s101
      %s104 = sshll.u32 [#allocation2], 4
      %s105 = int_to_ptr.vmem [resolvable:$true] %s104
      %107 = dma.vmem_to_hbm [thread:$0]  %s105, 128, %s2, [#allocation3]
    $region13: #{absolute_spatial_positional_embedding.1} parent=1 // pred_fallthru
      _
    // Predicated region
    $region14: #{absolute_spatial_positional_embedding.1} parent=1 // pred_check
      _
    $region15: #{absolute_spatial_positional_embedding.1} parent=1 // pred_check_branch
      %109 = sbr.rel (0) target = $region17
    $region16: #{absolute_spatial_positional_embedding.1} parent=1 // pred_region
      %110 = dma.done [#allocation3], 128
    $region17: #{absolute_spatial_positional_embedding.1} parent=1 // pred_fallthru
      _
    %111 = vsyncpa [#allocation3], 1

</llo_original>
